<compile_context>
chip_gen: v7x
topology: tpu7x:2x2x1
jax: 0.10.0
libtpu: 0.0.40
codegen_flags: <defaults>
</compile_context>

<pallas_src>
import functools

import jax
import jax.numpy as jnp
from jax.experimental import pallas as pl
from jax.experimental.pallas import tpu as pltpu


# ---------------------------------------------------------------------------
# Fused kernel: gate + pooled-sum accumulation + SA epilogue, both streams.
# Layout is channel-major: C on sublanes, an HW tile on the 128-lane axis.
# Grid = (N, HW_tiles); the HW axis is the (arbitrary) reduction axis.
# ---------------------------------------------------------------------------
def _bcfm_kernel(xr_ref, xd_ref,
                 w1r_ref, b1r_ref, w2r_ref, b2r_ref,
                 w1d_ref, b1d_ref, w2d_ref, b2d_ref,
                 zr_ref, zd_ref,
                 acc_r_ref, acc_d_ref,
                 *, hw, thw, inv_hw):
    t = pl.program_id(1)
    n_t = pl.num_programs(1)
    ragged = (hw % thw) != 0            # static: is the last HW tile partial?

    @pl.when(t == 0)
    def _init():
        acc_r_ref[...] = jnp.zeros_like(acc_r_ref)
        acc_d_ref[...] = jnp.zeros_like(acc_d_ref)

    def _gate(x_ref, w1_ref, b1_ref, acc_ref):
        x = x_ref[0]                                             # (C, thw) bf16
        # Folded-BN 1x1 conv: y = relu(W'@x + b); bf16 matmul, f32 accumulation.
        y = jnp.dot(w1_ref[...], x, preferred_element_type=jnp.float32)
        y = jnp.maximum(y + b1_ref[...], 0.0)                    # (C, thw) f32
        f = x.astype(jnp.float32) * y                            # gate (C_in == C_out)

        if not ragged:
            acc_ref[...] += f                                    # lane-preserving VALU add
        else:
            @pl.when(t < n_t - 1)
            def _():
                acc_ref[...] += f

            @pl.when(t == n_t - 1)
            def _():
                # Mask columns beyond HW (their VMEM content is unspecified).
                col = jax.lax.broadcasted_iota(jnp.int32, f.shape, 1)
                valid = hw - t * thw
                acc_ref[...] += jnp.where(col < valid, f, 0.0)

    _gate(xr_ref, w1r_ref, b1r_ref, acc_r_ref)
    _gate(xd_ref, w1d_ref, b1d_ref, acc_d_ref)

    @pl.when(t == n_t - 1)
    def _finalize():
        def _sa(acc_ref, w2_ref, b2_ref, z_ref):
            # Single cross-lane reduce per (batch, stream), then the tiny SA matvec.
            pooled = jnp.sum(acc_ref[...], axis=1, keepdims=True) * inv_hw   # (C, 1)
            z = jnp.dot(w2_ref[...], pooled, preferred_element_type=jnp.float32)
            z = jnp.maximum(z + b2_ref[...], 0.0)                # folded BN + ReLU
            z_ref[0] = jax.nn.sigmoid(z)                         # (C, 1)

        _sa(acc_r_ref, w2r_ref, b2r_ref, zr_ref)
        _sa(acc_d_ref, w2d_ref, b2d_ref, zd_ref)


# ---------------------------------------------------------------------------
# Tile selection & VMEM budgeting (no exact-divisor requirement, no full-HW
# fallback).  Budget covers: bf16 x double-buffered for both streams, f32
# accumulators, and f32 elementwise temporaries.
# ---------------------------------------------------------------------------
def _pick_hw_tile(hw, c, tile_vmem_budget=24 << 20, max_lanes=16384):
    per_lane_bytes = 40 * c       # 8C (x, 2 streams, dbl-buf, bf16) + 8C (acc) + 24C (temps)
    cap = (tile_vmem_budget // per_lane_bytes) // 128 * 128
    cap = max(128, min(max_lanes, cap))
    if hw <= cap:
        return hw                 # single block == full array dim (always legal)
    return cap                    # 128-multiple; ragged last tile masked in-kernel


def _vmem_limit_bytes(c, thw):
    tiles = 40 * c * thw                        # tile-proportional footprint (see above)
    weights = 4 * (6 * c * c + 8 * c)           # w1 bf16 + w2 f32 + b1 + b2, x2 streams x2 bufs
    est = tiles + weights + (4 << 20)           # slack for outputs / compiler scratch
    return int(min(max(est, 8 << 20), 48 << 20))


def bcfm_forward(rgb_nchw, depth_nchw, kparams):
    """Inputs NCHW (as in PyTorch). Returns (fusion_r, fusion_d), shape (N, C, 1, 1)."""
    N, C, H, W = rgb_nchw.shape
    HW = H * W
    # Lane-dense layout: (N, C, HW) with HW on the 128-lane axis.  bf16 reads.
    xr = rgb_nchw.reshape(N, C, HW).astype(jnp.bfloat16)
    xd = depth_nchw.reshape(N, C, HW).astype(jnp.bfloat16)
    pr, pd = kparams["rgb"], kparams["depth"]

    thw = _pick_hw_tile(HW, C)
    n_t = pl.cdiv(HW, thw)

    wspec = pl.BlockSpec((C, C), lambda n, t: (0, 0))
    bspec = pl.BlockSpec((C, 1), lambda n, t: (0, 0))
    xspec = pl.BlockSpec((1, C, thw), lambda n, t: (n, 0, t))
    zspec = pl.BlockSpec((1, C, 1), lambda n, t: (n, 0, 0))

    call = pl.pallas_call(
        functools.partial(_bcfm_kernel, hw=HW, thw=thw, inv_hw=1.0 / float(HW)),
        out_shape=(jax.ShapeDtypeStruct((N, C, 1), jnp.float32),
                   jax.ShapeDtypeStruct((N, C, 1), jnp.float32)),
        grid=(N, n_t),
        in_specs=[
            xspec, xspec,                      # x rgb, x depth (bf16)
            wspec, bspec, wspec, bspec,        # rgb:   w1', b1, w2', b2
            wspec, bspec, wspec, bspec,        # depth: w1', b1, w2', b2
        ],
        out_specs=(zspec, zspec),
        scratch_shapes=[pltpu.VMEM((C, thw), jnp.float32),
                        pltpu.VMEM((C, thw), jnp.float32)],
        compiler_params=pltpu.CompilerParams(
            dimension_semantics=("parallel", "arbitrary"),
            vmem_limit_bytes=_vmem_limit_bytes(C, thw)),
        cost_estimate=pl.CostEstimate(
            flops=int(2 * (2 * N * HW * C * C + 4 * N * HW * C)
                      + 2 * N * (2 * C * C + 4 * C)),
            transcendentals=int(2 * N * C),
            bytes_accessed=int(2 * N * C * HW * 2
                               + 2 * (C * C * 2 + C * 4 + C * C * 4 + C * 4)
                               + 2 * N * C * 4)),
    )
    zr, zd = call(xr, xd,
                  pr["w1"], pr["b1"], pr["w2"], pr["b2"],
                  pd["w1"], pd["b1"], pd["w2"], pd["b2"])
    return zr.reshape(N, C, 1, 1), zd.reshape(N, C, 1, 1)


# ---------------------------------------------------------------------------
# Parameters: raw (PyTorch-style) params + inference-mode folding for the kernel.
# ---------------------------------------------------------------------------
def make_bcfm_params(input_dim, output_dim):
    assert input_dim == output_dim, "BCFM multiplies x by conv(x); dims must match"
    C = input_dim
    key = jax.random.PRNGKey(42)
    ks = jax.random.split(key, 4)

    def conv_w(k):
        # PyTorch conv weight (C_out, C_in, 1, 1) stored as (C_out, C_in)
        return jax.random.normal(k, (C, C), dtype=jnp.float32) * 0.1

    def bn_stats(i):
        idx = jnp.arange(C, dtype=jnp.float32)
        return dict(gamma=1.0 + 0.01 * (idx + i), beta=0.02 * (idx - i),
                    mean=0.03 * idx, var=1.0 + 0.05 * idx)

    params = {}
    for name, ka, kb, i in (("rgb", ks[0], ks[1], 0), ("depth", ks[2], ks[3], 1)):
        params[name] = dict(w1=conv_w(ka), bn1=bn_stats(2 * i),
                            w2=conv_w(kb), bn2=bn_stats(2 * i + 1))
    return params


def fold_bcfm_params(params, eps=1e-5):
    """Fold inference BN into the conv weights: W' = diag(s) @ W, b = beta - mean*s."""
    out = {}
    for name, p in params.items():
        s1 = p["bn1"]["gamma"] / jnp.sqrt(p["bn1"]["var"] + eps)
        b1 = p["bn1"]["beta"] - p["bn1"]["mean"] * s1
        s2 = p["bn2"]["gamma"] / jnp.sqrt(p["bn2"]["var"] + eps)
        b2 = p["bn2"]["beta"] - p["bn2"]["mean"] * s2
        out[name] = dict(
            w1=(s1[:, None] * p["w1"]).astype(jnp.bfloat16),   # hot-loop weight in bf16
            b1=b1.reshape(-1, 1).astype(jnp.float32),
            w2=(s2[:, None] * p["w2"]).astype(jnp.float32),    # tiny SA matvec stays f32
            b2=b2.reshape(-1, 1).astype(jnp.float32),
        )
    return out


# ---------------------------------------------------------------------------
# Pure-JAX f32 reference (unfolded BN, PyTorch graph) for correctness checking.
# ---------------------------------------------------------------------------
def _reference(rgb, depth, params, eps=1e-5):
    def bn(x, p):
        shape = (1, -1) + (1,) * (x.ndim - 2)
        g = p["gamma"].reshape(shape); b = p["beta"].reshape(shape)
        m = p["mean"].reshape(shape); v = p["var"].reshape(shape)
        return (x - m) * (g / jnp.sqrt(v + eps)) + b

    def stream(x, p):
        N, C, H, W = x.shape
        xf = x.reshape(N, C, H * W).astype(jnp.float32)
        y = jnp.einsum("oc,ncp->nop", p["w1"], xf)
        y = jnp.maximum(bn(y, p["bn1"]), 0.0)
        f = xf * y
        mean = jnp.mean(f, axis=2)                               # (N, C)
        z = jnp.einsum("oc,nc->no", p["w2"], mean)
        z = jnp.maximum(bn(z, p["bn2"]), 0.0)
        return jax.nn.sigmoid(z).reshape(N, C, 1, 1)

    return stream(rgb, params["rgb"]), stream(depth, params["depth"])


if __name__ == "__main__":
    N, C, H, W = 2, 4, 16, 16
    key = jax.random.PRNGKey(0)
    k_rgb, k_depth = jax.random.split(key)
    # Activations are kept in bf16 (the format the kernel reads from HBM).
    rgb = jax.random.normal(k_rgb, (N, C, H, W), dtype=jnp.float32).astype(jnp.bfloat16)
    depth = jax.random.normal(k_depth, (N, C, H, W), dtype=jnp.float32).astype(jnp.bfloat16)

    params = make_bcfm_params(C, C)
    kparams = fold_bcfm_params(params)

    fusion_r, fusion_d = bcfm_forward(rgb, depth, kparams)
    jax.block_until_ready((fusion_r, fusion_d))

    ref_r, ref_d = _reference(rgb, depth, params)
    assert fusion_r.shape == (N, C, 1, 1) and fusion_d.shape == (N, C, 1, 1)
    # bf16 matmul + folded BN vs. f32 unfolded reference -> tolerance, not bit parity.
    assert jnp.allclose(fusion_r, ref_r, atol=2e-2, rtol=2e-2)
    assert jnp.allclose(fusion_d, ref_d, atol=2e-2, rtol=2e-2)

    print("KERNEL_OK")
</pallas_src>

<mosaic_0001>
module attributes {stable_mosaic.version = 11 : i64} {
  func.func @_bcfm_kernel(%arg0: i32, %arg1: i32, %arg2: memref<1x4x256xbf16, #tpu.memory_space<vmem>>, %arg3: memref<1x4x256xbf16, #tpu.memory_space<vmem>>, %arg4: memref<4x4xbf16, #tpu.memory_space<vmem>>, %arg5: memref<4x1xf32, #tpu.memory_space<vmem>>, %arg6: memref<4x4xf32, #tpu.memory_space<vmem>>, %arg7: memref<4x1xf32, #tpu.memory_space<vmem>>, %arg8: memref<4x4xbf16, #tpu.memory_space<vmem>>, %arg9: memref<4x1xf32, #tpu.memory_space<vmem>>, %arg10: memref<4x4xf32, #tpu.memory_space<vmem>>, %arg11: memref<4x1xf32, #tpu.memory_space<vmem>>, %arg12: memref<1x4x1xf32, #tpu.memory_space<vmem>>, %arg13: memref<1x4x1xf32, #tpu.memory_space<vmem>>, %arg14: memref<4x256xf32, #tpu.memory_space<vmem>>, %arg15: memref<4x256xf32, #tpu.memory_space<vmem>>) attributes {dimension_semantics = [#tpu.dimension_semantics<parallel>, #tpu.dimension_semantics<arbitrary>], iteration_bounds = array<i64: 2, 1>, scalar_prefetch = 0 : i64, scratch_operands = 2 : i64, tpu.core_type = #tpu.core_type<tc>, window_params = [{transform_indices = @transform_0, window_bounds = array<i64: 1, 4, 256>}, {transform_indices = @transform_1, window_bounds = array<i64: 1, 4, 256>}, {pipeline_mode = #tpu.pipeline_mode<synchronous>, transform_indices = @transform_2, window_bounds = array<i64: 4, 4>}, {pipeline_mode = #tpu.pipeline_mode<synchronous>, transform_indices = @transform_3, window_bounds = array<i64: 4, 1>}, {pipeline_mode = #tpu.pipeline_mode<synchronous>, transform_indices = @transform_4, window_bounds = array<i64: 4, 4>}, {pipeline_mode = #tpu.pipeline_mode<synchronous>, transform_indices = @transform_5, window_bounds = array<i64: 4, 1>}, {pipeline_mode = #tpu.pipeline_mode<synchronous>, transform_indices = @transform_6, window_bounds = array<i64: 4, 4>}, {pipeline_mode = #tpu.pipeline_mode<synchronous>, transform_indices = @transform_7, window_bounds = array<i64: 4, 1>}, {pipeline_mode = #tpu.pipeline_mode<synchronous>, transform_indices = @transform_8, window_bounds = array<i64: 4, 4>}, {pipeline_mode = #tpu.pipeline_mode<synchronous>, transform_indices = @transform_9, window_bounds = array<i64: 4, 1>}, {transform_indices = @transform_10, window_bounds = array<i64: 1, 4, 1>}, {transform_indices = @transform_11, window_bounds = array<i64: 1, 4, 1>}]} {
    %c0_i32 = arith.constant 0 : i32
    %0 = arith.cmpi eq, %arg1, %c0_i32 : i32
    %1 = arith.extui %0 : i1 to i32
    %c0_i32_0 = arith.constant 0 : i32
    %2 = arith.cmpi ne, %1, %c0_i32_0 : i32
    scf.if %2 {
      %cst_27 = arith.constant 0.000000e+00 : f32
      %34 = vector.broadcast %cst_27 : f32 to vector<4x256xf32>
      %c0_28 = arith.constant 0 : index
      %c0_29 = arith.constant 0 : index
      %35 = vector.load %arg14[%c0_28, %c0_29] : memref<4x256xf32, #tpu.memory_space<vmem>>, vector<4x256xf32>
      tpu.vector_store %arg14[%c0_28, %c0_29], %34 {strides = array<i32>} : memref<4x256xf32, #tpu.memory_space<vmem>>, vector<4x256xf32>,
      %cst_30 = arith.constant 0.000000e+00 : f32
      %36 = vector.broadcast %cst_30 : f32 to vector<4x256xf32>
      %c0_31 = arith.constant 0 : index
      %c0_32 = arith.constant 0 : index
      %37 = vector.load %arg15[%c0_31, %c0_32] : memref<4x256xf32, #tpu.memory_space<vmem>>, vector<4x256xf32>
      tpu.vector_store %arg15[%c0_31, %c0_32], %36 {strides = array<i32>} : memref<4x256xf32, #tpu.memory_space<vmem>>, vector<4x256xf32>,
    } else {
    }
    %c0 = arith.constant 0 : index
    %c0_1 = arith.constant 0 : index
    %c0_2 = arith.constant 0 : index
    %3 = vector.load %arg2[%c0, %c0_1, %c0_2] : memref<1x4x256xbf16, #tpu.memory_space<vmem>>, vector<1x4x256xbf16>
    %4 = vector.shape_cast %3 : vector<1x4x256xbf16> to vector<4x256xbf16>
    %c0_3 = arith.constant 0 : index
    %c0_4 = arith.constant 0 : index
    %5 = vector.load %arg4[%c0_3, %c0_4] : memref<4x4xbf16, #tpu.memory_space<vmem>>, vector<4x4xbf16>
    %cst = arith.constant dense<0.000000e+00> : vector<4x256xf32>
    %6 = tpu.matmul %5, %4, %cst {dimension_numbers = #tpu.dot_dimension_numbers<[1], [0], [0], [1], [0, 0, 1, 1], [], []>} : vector<4x4xbf16>, vector<4x256xbf16>, vector<4x256xf32> -> vector<4x256xf32>
    %c0_5 = arith.constant 0 : index
    %c0_6 = arith.constant 0 : index
    %7 = vector.load %arg5[%c0_5, %c0_6] : memref<4x1xf32, #tpu.memory_space<vmem>>, vector<4x1xf32>
    %8 = vector.broadcast %7 : vector<4x1xf32> to vector<4x256xf32>
    %9 = arith.addf %6, %8 : vector<4x256xf32>
    %cst_7 = arith.constant 0.000000e+00 : f32
    %10 = vector.broadcast %cst_7 : f32 to vector<4x256xf32>
    %11 = arith.maximumf %9, %10 : vector<4x256xf32>
    %12 = arith.extf %4 : vector<4x256xbf16> to vector<4x256xf32>
    %13 = arith.mulf %12, %11 : vector<4x256xf32>
    %c0_8 = arith.constant 0 : index
    %c0_9 = arith.constant 0 : index
    %14 = vector.load %arg14[%c0_8, %c0_9] : memref<4x256xf32, #tpu.memory_space<vmem>>, vector<4x256xf32>
    %15 = arith.addf %14, %13 : vector<4x256xf32>
    %c0_10 = arith.constant 0 : index
    %c0_11 = arith.constant 0 : index
    %16 = vector.load %arg14[%c0_10, %c0_11] : memref<4x256xf32, #tpu.memory_space<vmem>>, vector<4x256xf32>
    tpu.vector_store %arg14[%c0_10, %c0_11], %15 {strides = array<i32>} : memref<4x256xf32, #tpu.memory_space<vmem>>, vector<4x256xf32>,
    %c0_12 = arith.constant 0 : index
    %c0_13 = arith.constant 0 : index
    %c0_14 = arith.constant 0 : index
    %17 = vector.load %arg3[%c0_12, %c0_13, %c0_14] : memref<1x4x256xbf16, #tpu.memory_space<vmem>>, vector<1x4x256xbf16>
    %18 = vector.shape_cast %17 : vector<1x4x256xbf16> to vector<4x256xbf16>
    %c0_15 = arith.constant 0 : index
    %c0_16 = arith.constant 0 : index
    %19 = vector.load %arg8[%c0_15, %c0_16] : memref<4x4xbf16, #tpu.memory_space<vmem>>, vector<4x4xbf16>
    %cst_17 = arith.constant dense<0.000000e+00> : vector<4x256xf32>
    %20 = tpu.matmul %19, %18, %cst_17 {dimension_numbers = #tpu.dot_dimension_numbers<[1], [0], [0], [1], [0, 0, 1, 1], [], []>} : vector<4x4xbf16>, vector<4x256xbf16>, vector<4x256xf32> -> vector<4x256xf32>
    %c0_18 = arith.constant 0 : index
    %c0_19 = arith.constant 0 : index
    %21 = vector.load %arg9[%c0_18, %c0_19] : memref<4x1xf32, #tpu.memory_space<vmem>>, vector<4x1xf32>
    %22 = vector.broadcast %21 : vector<4x1xf32> to vector<4x256xf32>
    %23 = arith.addf %20, %22 : vector<4x256xf32>
    %cst_20 = arith.constant 0.000000e+00 : f32
    %24 = vector.broadcast %cst_20 : f32 to vector<4x256xf32>
    %25 = arith.maximumf %23, %24 : vector<4x256xf32>
    %26 = arith.extf %18 : vector<4x256xbf16> to vector<4x256xf32>
    %27 = arith.mulf %26, %25 : vector<4x256xf32>
    %c0_21 = arith.constant 0 : index
    %c0_22 = arith.constant 0 : index
    %28 = vector.load %arg15[%c0_21, %c0_22] : memref<4x256xf32, #tpu.memory_space<vmem>>, vector<4x256xf32>
    %29 = arith.addf %28, %27 : vector<4x256xf32>
    %c0_23 = arith.constant 0 : index
    %c0_24 = arith.constant 0 : index
    %30 = vector.load %arg15[%c0_23, %c0_24] : memref<4x256xf32, #tpu.memory_space<vmem>>, vector<4x256xf32>
    tpu.vector_store %arg15[%c0_23, %c0_24], %29 {strides = array<i32>} : memref<4x256xf32, #tpu.memory_space<vmem>>, vector<4x256xf32>,
    %c0_i32_25 = arith.constant 0 : i32
    %31 = arith.cmpi eq, %arg1, %c0_i32_25 : i32
    %32 = arith.extui %31 : i1 to i32
    %c0_i32_26 = arith.constant 0 : i32
    %33 = arith.cmpi ne, %32, %c0_i32_26 : i32
    scf.if %33 {
      %c0_27 = arith.constant 0 : index
      %c0_28 = arith.constant 0 : index
      %34 = vector.load %arg14[%c0_27, %c0_28] : memref<4x256xf32, #tpu.memory_space<vmem>>, vector<4x256xf32>
      %cst_29 = arith.constant dense<0.000000e+00> : vector<4xf32>
      %35 = vector.multi_reduction <add>, %34, %cst_29 [1] : vector<4x256xf32> to vector<4xf32>
      %36 = vector.shape_cast %35 : vector<4xf32> to vector<4x1xf32>
      %cst_30 = arith.constant 3.906250e-03 : f32
      %37 = vector.broadcast %cst_30 : f32 to vector<4x1xf32>
      %38 = arith.mulf %36, %37 : vector<4x1xf32>
      %c0_31 = arith.constant 0 : index
      %c0_32 = arith.constant 0 : index
      %39 = vector.load %arg6[%c0_31, %c0_32] : memref<4x4xf32, #tpu.memory_space<vmem>>, vector<4x4xf32>
      %cst_33 = arith.constant dense<0.000000e+00> : vector<4x1xf32>
      %40 = tpu.matmul %39, %38, %cst_33 {dimension_numbers = #tpu.dot_dimension_numbers<[1], [0], [0], [1], [0, 0, 1, 1], [], []>} : vector<4x4xf32>, vector<4x1xf32>, vector<4x1xf32> -> vector<4x1xf32>
      %c0_34 = arith.constant 0 : index
      %c0_35 = arith.constant 0 : index
      %41 = vector.load %arg7[%c0_34, %c0_35] : memref<4x1xf32, #tpu.memory_space<vmem>>, vector<4x1xf32>
      %42 = arith.addf %40, %41 : vector<4x1xf32>
      %cst_36 = arith.constant 0.000000e+00 : f32
      %43 = vector.broadcast %cst_36 : f32 to vector<4x1xf32>
      %44 = arith.maximumf %42, %43 : vector<4x1xf32>
      %45 = arith.negf %44 : vector<4x1xf32>
      %46 = math.exp %45 : vector<4x1xf32>
      %cst_37 = arith.constant 1.000000e+00 : f32
      %47 = vector.broadcast %cst_37 : f32 to vector<4x1xf32>
      %48 = arith.addf %47, %46 : vector<4x1xf32>
      %49 = arith.divf %47, %48 : vector<4x1xf32>
      %c0_38 = arith.constant 0 : index
      %c0_39 = arith.constant 0 : index
      %c0_40 = arith.constant 0 : index
      %50 = vector.load %arg12[%c0_38, %c0_39, %c0_40] : memref<1x4x1xf32, #tpu.memory_space<vmem>>, vector<1x4x1xf32>
      %51 = vector.shape_cast %50 : vector<1x4x1xf32> to vector<4x1xf32>
      %52 = vector.shape_cast %49 : vector<4x1xf32> to vector<1x4x1xf32>
      tpu.vector_store %arg12[%c0_38, %c0_39, %c0_40], %52 {strides = array<i32>} : memref<1x4x1xf32, #tpu.memory_space<vmem>>, vector<1x4x1xf32>,
      %c0_41 = arith.constant 0 : index
      %c0_42 = arith.constant 0 : index
      %53 = vector.load %arg15[%c0_41, %c0_42] : memref<4x256xf32, #tpu.memory_space<vmem>>, vector<4x256xf32>
      %cst_43 = arith.constant dense<0.000000e+00> : vector<4xf32>
      %54 = vector.multi_reduction <add>, %53, %cst_43 [1] : vector<4x256xf32> to vector<4xf32>
      %55 = vector.shape_cast %54 : vector<4xf32> to vector<4x1xf32>
      %cst_44 = arith.constant 3.906250e-03 : f32
      %56 = vector.broadcast %cst_44 : f32 to vector<4x1xf32>
      %57 = arith.mulf %55, %56 : vector<4x1xf32>
      %c0_45 = arith.constant 0 : index
      %c0_46 = arith.constant 0 : index
      %58 = vector.load %arg10[%c0_45, %c0_46] : memref<4x4xf32, #tpu.memory_space<vmem>>, vector<4x4xf32>
      %cst_47 = arith.constant dense<0.000000e+00> : vector<4x1xf32>
      %59 = tpu.matmul %58, %57, %cst_47 {dimension_numbers = #tpu.dot_dimension_numbers<[1], [0], [0], [1], [0, 0, 1, 1], [], []>} : vector<4x4xf32>, vector<4x1xf32>, vector<4x1xf32> -> vector<4x1xf32>
      %c0_48 = arith.constant 0 : index
      %c0_49 = arith.constant 0 : index
      %60 = vector.load %arg11[%c0_48, %c0_49] : memref<4x1xf32, #tpu.memory_space<vmem>>, vector<4x1xf32>
      %61 = arith.addf %59, %60 : vector<4x1xf32>
      %cst_50 = arith.constant 0.000000e+00 : f32
      %62 = vector.broadcast %cst_50 : f32 to vector<4x1xf32>
      %63 = arith.maximumf %61, %62 : vector<4x1xf32>
      %64 = arith.negf %63 : vector<4x1xf32>
      %65 = math.exp %64 : vector<4x1xf32>
      %cst_51 = arith.constant 1.000000e+00 : f32
      %66 = vector.broadcast %cst_51 : f32 to vector<4x1xf32>
      %67 = arith.addf %66, %65 : vector<4x1xf32>
      %68 = arith.divf %66, %67 : vector<4x1xf32>
      %c0_52 = arith.constant 0 : index
      %c0_53 = arith.constant 0 : index
      %c0_54 = arith.constant 0 : index
      %69 = vector.load %arg13[%c0_52, %c0_53, %c0_54] : memref<1x4x1xf32, #tpu.memory_space<vmem>>, vector<1x4x1xf32>
      %70 = vector.shape_cast %69 : vector<1x4x1xf32> to vector<4x1xf32>
      %71 = vector.shape_cast %68 : vector<4x1xf32> to vector<1x4x1xf32>
      tpu.vector_store %arg13[%c0_52, %c0_53, %c0_54], %71 {strides = array<i32>} : memref<1x4x1xf32, #tpu.memory_space<vmem>>, vector<1x4x1xf32>,
    } else {
    }
    return
  }
  func.func @transform_0(%arg0: i32, %arg1: i32) -> (i32, i32, i32) {
    %c0_i32 = arith.constant 0 : i32
    %c0_i32_0 = arith.constant 0 : i32
    return %arg0, %c0_i32, %arg1 : i32, i32, i32
  }
  func.func @transform_1(%arg0: i32, %arg1: i32) -> (i32, i32, i32) {
    %c0_i32 = arith.constant 0 : i32
    %c0_i32_0 = arith.constant 0 : i32
    return %arg0, %c0_i32, %arg1 : i32, i32, i32
  }
  func.func @transform_2(%arg0: i32, %arg1: i32) -> (i32, i32) {
    %c0_i32 = arith.constant 0 : i32
    %c0_i32_0 = arith.constant 0 : i32
    %c0_i32_1 = arith.constant 0 : i32
    return %c0_i32, %c0_i32_0 : i32, i32
  }
  func.func @transform_3(%arg0: i32, %arg1: i32) -> (i32, i32) {
    %c0_i32 = arith.constant 0 : i32
    %c0_i32_0 = arith.constant 0 : i32
    %c0_i32_1 = arith.constant 0 : i32
    return %c0_i32, %c0_i32_0 : i32, i32
  }
  func.func @transform_4(%arg0: i32, %arg1: i32) -> (i32, i32) {
    %c0_i32 = arith.constant 0 : i32
    %c0_i32_0 = arith.constant 0 : i32
    %c0_i32_1 = arith.constant 0 : i32
    return %c0_i32, %c0_i32_0 : i32, i32
  }
  func.func @transform_5(%arg0: i32, %arg1: i32) -> (i32, i32) {
    %c0_i32 = arith.constant 0 : i32
    %c0_i32_0 = arith.constant 0 : i32
    %c0_i32_1 = arith.constant 0 : i32
    return %c0_i32, %c0_i32_0 : i32, i32
  }
  func.func @transform_6(%arg0: i32, %arg1: i32) -> (i32, i32) {
    %c0_i32 = arith.constant 0 : i32
    %c0_i32_0 = arith.constant 0 : i32
    %c0_i32_1 = arith.constant 0 : i32
    return %c0_i32, %c0_i32_0 : i32, i32
  }
  func.func @transform_7(%arg0: i32, %arg1: i32) -> (i32, i32) {
    %c0_i32 = arith.constant 0 : i32
    %c0_i32_0 = arith.constant 0 : i32
    %c0_i32_1 = arith.constant 0 : i32
    return %c0_i32, %c0_i32_0 : i32, i32
  }
  func.func @transform_8(%arg0: i32, %arg1: i32) -> (i32, i32) {
    %c0_i32 = arith.constant 0 : i32
    %c0_i32_0 = arith.constant 0 : i32
    %c0_i32_1 = arith.constant 0 : i32
    return %c0_i32, %c0_i32_0 : i32, i32
  }
  func.func @transform_9(%arg0: i32, %arg1: i32) -> (i32, i32) {
    %c0_i32 = arith.constant 0 : i32
    %c0_i32_0 = arith.constant 0 : i32
    %c0_i32_1 = arith.constant 0 : i32
    return %c0_i32, %c0_i32_0 : i32, i32
  }
  func.func @transform_10(%arg0: i32, %arg1: i32) -> (i32, i32, i32) {
    %c0_i32 = arith.constant 0 : i32
    %c0_i32_0 = arith.constant 0 : i32
    %c0_i32_1 = arith.constant 0 : i32
    return %arg0, %c0_i32, %c0_i32_0 : i32, i32, i32
  }
  func.func @transform_11(%arg0: i32, %arg1: i32) -> (i32, i32, i32) {
    %c0_i32 = arith.constant 0 : i32
    %c0_i32_0 = arith.constant 0 : i32
    %c0_i32_1 = arith.constant 0 : i32
    return %arg0, %c0_i32, %c0_i32_0 : i32, i32, i32
  }
}

</mosaic_0001>

<llo_original>
// kernel: tpu_custom_call.1
$region0: #{tpu_custom_call.1}
  #allocation0 [shape = 'u32[]', space=smem, size = 0x4, offset = 0x4, fixed_abs, tag = 'smem constant byte address 0x4 - core index']
  #allocation1 [shape = 'u32[144,128]{1,0:T(1,128)}', space=vmem, size = 0x12000, scoped, tag = 'internal scratch']
  #allocation2 [shape = 'f32[4,256]{1,0:T(4,128)}', space=vmem, size = 0x1000, scoped, tag = 'scratch operand']
  #allocation3 [shape = 'f32[4,256]{1,0:T(4,128)}', space=vmem, size = 0x1000, scoped, tag = 'scratch operand']
  %s0 = inlined_call_operand.vmem [shape: bf16[2,4,256], index: 0, kind: input, shape index: {}]
  %s1 = inlined_call_operand.vmem [shape: bf16[2,4,256], index: 1, kind: input, shape index: {}]
  %s2 = inlined_call_operand.vmem [shape: bf16[4,4], index: 2, kind: input, shape index: {}]
  %s3 = inlined_call_operand.vmem [shape: f32[4,1], index: 3, kind: input, shape index: {}]
  %s4 = inlined_call_operand.vmem [shape: f32[4,4], index: 4, kind: input, shape index: {}]
  %s5 = inlined_call_operand.vmem [shape: f32[4,1], index: 5, kind: input, shape index: {}]
  %s6 = inlined_call_operand.vmem [shape: bf16[4,4], index: 6, kind: input, shape index: {}]
  %s7 = inlined_call_operand.vmem [shape: f32[4,1], index: 7, kind: input, shape index: {}]
  %s8 = inlined_call_operand.vmem [shape: f32[4,4], index: 8, kind: input, shape index: {}]
  %s9 = inlined_call_operand.vmem [shape: f32[4,1], index: 9, kind: input, shape index: {}]
  %s10 = inlined_call_operand.vmem [shape: f32[2,4,1], index: 10, kind: output, shape index: {0}]
  %s11 = inlined_call_operand.vmem [shape: f32[2,4,1], index: 11, kind: output, shape index: {1}]
  %12 = xla_tuple %s10, %s11
  %s13 = sld [smem:[#allocation0]]
  $region89: #{tpu_custom_call.1} parent=0
    _
  %s15 = ssub.s32 1, %s13
  %s16 = scalar_select 0, %s15, %s13
  loop: start=0, step=1, limit=4
  $region2: #{tpu_custom_call.1} parent=0 // loop_pre_header
    _
  $region3: #{tpu_custom_call.1} parent=0 // loop_header
    %s18 = sphi 0, %s22
    %p19 = scmp.ge.s32.totalorder %s18, 4
    %s25 = sphi 0, %s37
    %s26 = sphi 0, %s33
    %s27 = sphi 0, %s25
    %s28 = sphi 0, %s26
    %s29 = sphi 0, %s27
    %s30 = sphi 0, %s28
    %s42 = sphi 0, %s44
    %s45 = sphi 0, %s42
    %s46 = sphi 0, %s45
    %s62 = sphi 0, %s46
    %s70 = sphi 0, %s72
    %s73 = sphi 0, %s70
    %s74 = sphi 0, %s73
    %s90 = sphi 0, %s74
    %s94 = sphi 0, %s94
    %s96 = sphi 0, %s94
    %s97 = sphi 0, %s96
    %s111 = sphi 0, %s97
    %s115 = sphi 0, %s115
    %s117 = sphi 0, %s115
    %s118 = sphi 0, %s117
    %s132 = sphi 0, %s118
    %s136 = sphi 0, %s136
    %s138 = sphi 0, %s136
    %s139 = sphi 0, %s138
    %s153 = sphi 0, %s139
    %s157 = sphi 0, %s157
    %s159 = sphi 0, %s157
    %s160 = sphi 0, %s159
    %s174 = sphi 0, %s160
    %s178 = sphi 0, %s178
    %s180 = sphi 0, %s178
    %s181 = sphi 0, %s180
    %s195 = sphi 0, %s181
    %s199 = sphi 0, %s199
    %s201 = sphi 0, %s199
    %s202 = sphi 0, %s201
    %s216 = sphi 0, %s202
    %s220 = sphi 0, %s220
    %s222 = sphi 0, %s220
    %s223 = sphi 0, %s222
    %s237 = sphi 0, %s223
    %s241 = sphi 0, %s241
    %s243 = sphi 0, %s241
    %s244 = sphi 0, %s243
    %s258 = sphi 0, %s244
    %s264 = sphi 0, %s266
    %s267 = sphi 0, %s264
    %s268 = sphi 0, %s267
    %s284 = sphi 0, %s268
    %s290 = sphi 0, %s292
    %s293 = sphi 0, %s290
    %s294 = sphi 0, %s293
    %s310 = sphi 0, %s294
  $region4: #{tpu_custom_call.1} parent=0 // loop_header_branch
    %21 = sbr.rel (%p19) target = $region8
  $region5: #{tpu_custom_call.1} parent=0 // loop_body
    %s23 = ssub.s32 %s18, 1
    %s24 = ssub.s32 %s18, 2
    %s31 = sadd.s32 1, %s26
    %p32 = scmp.ge.s32.totalorder %s31, 1
    %s33 = scalar_select %p32, 0, %s31
    %s34 = sadd.s32 1, %s25
    %s35 = scalar_select %p32, %s34, %s25
    %p36 = scmp.ge.s32.totalorder %s35, 2
    %s37 = scalar_select %p36, 0, %s35
    %s38 = ssub.s32 %s25, %s37
    %s39 = ssub.s32 %s26, %s33
    %s40 = sor.u32 %s38, %s39
    %p41 = scmp.eq.s32.totalorder %s40, 0
    %s43 = sadd.s32 %s42, 1
    %s44 = scalar_select %p41, %s42, %s43
    %p47 = pneg %p41
    %p48 = scmp.eq.s32.totalorder %s18, 1
    %p49 = por %p47, %p48
    %p50 = scmp.ne.s32.totalorder %s42, %s45
    %p51 = scmp.eq.s32.totalorder %s18, 0
    %p52 = por %p50, %p51
    %p53 = scmp.ne.s32.totalorder %s42, %s45
    %p54 = scmp.eq.s32.totalorder %s23, 1
    %p55 = por %p53, %p54
    %p56 = scmp.ne.s32.totalorder %s45, %s46
    %p57 = scmp.eq.s32.totalorder %s23, 0
    %p58 = por %p56, %p57
    %p59 = scmp.ne.s32.totalorder %s45, %s46
    %p60 = scmp.eq.s32.totalorder %s24, 1
    %p61 = por %p59, %p60
    %p63 = scmp.ne.s32.totalorder %s46, %s62
    %p64 = scmp.eq.s32.totalorder %s24, 0
    %p65 = por %p63, %p64
    %s66 = ssub.s32 %s25, %s37
    %s67 = ssub.s32 %s26, %s33
    %s68 = sor.u32 %s66, %s67
    %p69 = scmp.eq.s32.totalorder %s68, 0
    %s71 = sadd.s32 %s70, 1
    %s72 = scalar_select %p69, %s70, %s71
    %p75 = pneg %p69
    %p76 = scmp.eq.s32.totalorder %s18, 1
    %p77 = por %p75, %p76
    %p78 = scmp.ne.s32.totalorder %s70, %s73
    %p79 = scmp.eq.s32.totalorder %s18, 0
    %p80 = por %p78, %p79
    %p81 = scmp.ne.s32.totalorder %s70, %s73
    %p82 = scmp.eq.s32.totalorder %s23, 1
    %p83 = por %p81, %p82
    %p84 = scmp.ne.s32.totalorder %s73, %s74
    %p85 = scmp.eq.s32.totalorder %s23, 0
    %p86 = por %p84, %p85
    %p87 = scmp.ne.s32.totalorder %s73, %s74
    %p88 = scmp.eq.s32.totalorder %s24, 1
    %p89 = por %p87, %p88
    %p91 = scmp.ne.s32.totalorder %s74, %s90
    %p92 = scmp.eq.s32.totalorder %s24, 0
    %p93 = por %p91, %p92
    %s95 = sadd.s32 %s94, 1
    %p98 = scmp.eq.s32.totalorder %s18, 1
    %p99 = scmp.ne.s32.totalorder %s94, %s96
    %p100 = scmp.eq.s32.totalorder %s18, 0
    %p101 = por %p99, %p100
    %p102 = scmp.ne.s32.totalorder %s94, %s96
    %p103 = scmp.eq.s32.totalorder %s23, 1
    %p104 = por %p102, %p103
    %p105 = scmp.ne.s32.totalorder %s96, %s97
    %p106 = scmp.eq.s32.totalorder %s23, 0
    %p107 = por %p105, %p106
    %p108 = scmp.ne.s32.totalorder %s96, %s97
    %p109 = scmp.eq.s32.totalorder %s24, 1
    %p110 = por %p108, %p109
    %p112 = scmp.ne.s32.totalorder %s97, %s111
    %p113 = scmp.eq.s32.totalorder %s24, 0
    %p114 = por %p112, %p113
    %s116 = sadd.s32 %s115, 1
    %p119 = scmp.eq.s32.totalorder %s18, 1
    %p120 = scmp.ne.s32.totalorder %s115, %s117
    %p121 = scmp.eq.s32.totalorder %s18, 0
    %p122 = por %p120, %p121
    %p123 = scmp.ne.s32.totalorder %s115, %s117
    %p124 = scmp.eq.s32.totalorder %s23, 1
    %p125 = por %p123, %p124
    %p126 = scmp.ne.s32.totalorder %s117, %s118
    %p127 = scmp.eq.s32.totalorder %s23, 0
    %p128 = por %p126, %p127
    %p129 = scmp.ne.s32.totalorder %s117, %s118
    %p130 = scmp.eq.s32.totalorder %s24, 1
    %p131 = por %p129, %p130
    %p133 = scmp.ne.s32.totalorder %s118, %s132
    %p134 = scmp.eq.s32.totalorder %s24, 0
    %p135 = por %p133, %p134
    %s137 = sadd.s32 %s136, 1
    %p140 = scmp.eq.s32.totalorder %s18, 1
    %p141 = scmp.ne.s32.totalorder %s136, %s138
    %p142 = scmp.eq.s32.totalorder %s18, 0
    %p143 = por %p141, %p142
    %p144 = scmp.ne.s32.totalorder %s136, %s138
    %p145 = scmp.eq.s32.totalorder %s23, 1
    %p146 = por %p144, %p145
    %p147 = scmp.ne.s32.totalorder %s138, %s139
    %p148 = scmp.eq.s32.totalorder %s23, 0
    %p149 = por %p147, %p148
    %p150 = scmp.ne.s32.totalorder %s138, %s139
    %p151 = scmp.eq.s32.totalorder %s24, 1
    %p152 = por %p150, %p151
    %p154 = scmp.ne.s32.totalorder %s139, %s153
    %p155 = scmp.eq.s32.totalorder %s24, 0
    %p156 = por %p154, %p155
    %s158 = sadd.s32 %s157, 1
    %p161 = scmp.eq.s32.totalorder %s18, 1
    %p162 = scmp.ne.s32.totalorder %s157, %s159
    %p163 = scmp.eq.s32.totalorder %s18, 0
    %p164 = por %p162, %p163
    %p165 = scmp.ne.s32.totalorder %s157, %s159
    %p166 = scmp.eq.s32.totalorder %s23, 1
    %p167 = por %p165, %p166
    %p168 = scmp.ne.s32.totalorder %s159, %s160
    %p169 = scmp.eq.s32.totalorder %s23, 0
    %p170 = por %p168, %p169
    %p171 = scmp.ne.s32.totalorder %s159, %s160
    %p172 = scmp.eq.s32.totalorder %s24, 1
    %p173 = por %p171, %p172
    %p175 = scmp.ne.s32.totalorder %s160, %s174
    %p176 = scmp.eq.s32.totalorder %s24, 0
    %p177 = por %p175, %p176
    %s179 = sadd.s32 %s178, 1
    %p182 = scmp.eq.s32.totalorder %s18, 1
    %p183 = scmp.ne.s32.totalorder %s178, %s180
    %p184 = scmp.eq.s32.totalorder %s18, 0
    %p185 = por %p183, %p184
    %p186 = scmp.ne.s32.totalorder %s178, %s180
    %p187 = scmp.eq.s32.totalorder %s23, 1
    %p188 = por %p186, %p187
    %p189 = scmp.ne.s32.totalorder %s180, %s181
    %p190 = scmp.eq.s32.totalorder %s23, 0
    %p191 = por %p189, %p190
    %p192 = scmp.ne.s32.totalorder %s180, %s181
    %p193 = scmp.eq.s32.totalorder %s24, 1
    %p194 = por %p192, %p193
    %p196 = scmp.ne.s32.totalorder %s181, %s195
    %p197 = scmp.eq.s32.totalorder %s24, 0
    %p198 = por %p196, %p197
    %s200 = sadd.s32 %s199, 1
    %p203 = scmp.eq.s32.totalorder %s18, 1
    %p204 = scmp.ne.s32.totalorder %s199, %s201
    %p205 = scmp.eq.s32.totalorder %s18, 0
    %p206 = por %p204, %p205
    %p207 = scmp.ne.s32.totalorder %s199, %s201
    %p208 = scmp.eq.s32.totalorder %s23, 1
    %p209 = por %p207, %p208
    %p210 = scmp.ne.s32.totalorder %s201, %s202
    %p211 = scmp.eq.s32.totalorder %s23, 0
    %p212 = por %p210, %p211
    %p213 = scmp.ne.s32.totalorder %s201, %s202
    %p214 = scmp.eq.s32.totalorder %s24, 1
    %p215 = por %p213, %p214
    %p217 = scmp.ne.s32.totalorder %s202, %s216
    %p218 = scmp.eq.s32.totalorder %s24, 0
    %p219 = por %p217, %p218
    %s221 = sadd.s32 %s220, 1
    %p224 = scmp.eq.s32.totalorder %s18, 1
    %p225 = scmp.ne.s32.totalorder %s220, %s222
    %p226 = scmp.eq.s32.totalorder %s18, 0
    %p227 = por %p225, %p226
    %p228 = scmp.ne.s32.totalorder %s220, %s222
    %p229 = scmp.eq.s32.totalorder %s23, 1
    %p230 = por %p228, %p229
    %p231 = scmp.ne.s32.totalorder %s222, %s223
    %p232 = scmp.eq.s32.totalorder %s23, 0
    %p233 = por %p231, %p232
    %p234 = scmp.ne.s32.totalorder %s222, %s223
    %p235 = scmp.eq.s32.totalorder %s24, 1
    %p236 = por %p234, %p235
    %p238 = scmp.ne.s32.totalorder %s223, %s237
    %p239 = scmp.eq.s32.totalorder %s24, 0
    %p240 = por %p238, %p239
    %s242 = sadd.s32 %s241, 1
    %p245 = scmp.eq.s32.totalorder %s18, 1
    %p246 = scmp.ne.s32.totalorder %s241, %s243
    %p247 = scmp.eq.s32.totalorder %s18, 0
    %p248 = por %p246, %p247
    %p249 = scmp.ne.s32.totalorder %s241, %s243
    %p250 = scmp.eq.s32.totalorder %s23, 1
    %p251 = por %p249, %p250
    %p252 = scmp.ne.s32.totalorder %s243, %s244
    %p253 = scmp.eq.s32.totalorder %s23, 0
    %p254 = por %p252, %p253
    %p255 = scmp.ne.s32.totalorder %s243, %s244
    %p256 = scmp.eq.s32.totalorder %s24, 1
    %p257 = por %p255, %p256
    %p259 = scmp.ne.s32.totalorder %s244, %s258
    %p260 = scmp.eq.s32.totalorder %s24, 0
    %p261 = por %p259, %p260
    %s262 = ssub.s32 %s25, %s37
    %p263 = scmp.eq.s32.totalorder %s262, 0
    %s265 = sadd.s32 %s264, 1
    %s266 = scalar_select %p263, %s264, %s265
    %p269 = pneg %p263
    %p270 = scmp.eq.s32.totalorder %s18, 1
    %p271 = por %p269, %p270
    %p272 = scmp.ne.s32.totalorder %s264, %s267
    %p273 = scmp.eq.s32.totalorder %s18, 0
    %p274 = por %p272, %p273
    %p275 = scmp.ne.s32.totalorder %s264, %s267
    %p276 = scmp.eq.s32.totalorder %s23, 1
    %p277 = por %p275, %p276
    %p278 = scmp.ne.s32.totalorder %s267, %s268
    %p279 = scmp.eq.s32.totalorder %s23, 0
    %p280 = por %p278, %p279
    %p281 = scmp.ne.s32.totalorder %s267, %s268
    %p282 = scmp.eq.s32.totalorder %s24, 1
    %p283 = por %p281, %p282
    %p285 = scmp.ne.s32.totalorder %s268, %s284
    %p286 = scmp.eq.s32.totalorder %s24, 0
    %p287 = por %p285, %p286
    %s288 = ssub.s32 %s25, %s37
    %p289 = scmp.eq.s32.totalorder %s288, 0
    %s291 = sadd.s32 %s290, 1
    %s292 = scalar_select %p289, %s290, %s291
    %p295 = pneg %p289
    %p296 = scmp.eq.s32.totalorder %s18, 1
    %p297 = por %p295, %p296
    %p298 = scmp.ne.s32.totalorder %s290, %s293
    %p299 = scmp.eq.s32.totalorder %s18, 0
    %p300 = por %p298, %p299
    %p301 = scmp.ne.s32.totalorder %s290, %s293
    %p302 = scmp.eq.s32.totalorder %s23, 1
    %p303 = por %p301, %p302
    %p304 = scmp.ne.s32.totalorder %s293, %s294
    %p305 = scmp.eq.s32.totalorder %s23, 0
    %p306 = por %p304, %p305
    %p307 = scmp.ne.s32.totalorder %s293, %s294
    %p308 = scmp.eq.s32.totalorder %s24, 1
    %p309 = por %p307, %p308
    %p311 = scmp.ne.s32.totalorder %s294, %s310
    %p312 = scmp.eq.s32.totalorder %s24, 0
    %p313 = por %p311, %p312
    %p314 = scmp.le.s32.totalorder 1, %s18
    %p315 = scmp.lt.s32.totalorder %s18, 3
    %p316 = pnand %p314, %p315
    %p317 = pneg %p316
    // Predicated region
    $region9: #{tpu_custom_call.1} parent=5 // pred_check
      _
    $region10: #{tpu_custom_call.1} parent=5 // pred_check_branch
      %319 = sbr.rel (%p316) target = $region12
    $region11: #{tpu_custom_call.1} parent=5 // pred_region
      %s320 = ssub.s32 %s18, 1
      // Predicated region
      $region13: #{tpu_custom_call.1} parent=11 // pred_check
        %p321 = pneg %p107
      $region14: #{tpu_custom_call.1} parent=11 // pred_check_branch
        %323 = sbr.rel (%p321) target = $region16
      $region15: #{tpu_custom_call.1} parent=11 // pred_region
        _
      $region16: #{tpu_custom_call.1} parent=11 // pred_fallthru
        _
      // Predicated region
      $region17: #{tpu_custom_call.1} parent=11 // pred_check
        %p324 = pneg %p128
      $region18: #{tpu_custom_call.1} parent=11 // pred_check_branch
        %326 = sbr.rel (%p324) target = $region20
      $region19: #{tpu_custom_call.1} parent=11 // pred_region
        _
      $region20: #{tpu_custom_call.1} parent=11 // pred_fallthru
        _
      // Predicated region
      $region21: #{tpu_custom_call.1} parent=11 // pred_check
        %p327 = pneg %p149
      $region22: #{tpu_custom_call.1} parent=11 // pred_check_branch
        %329 = sbr.rel (%p327) target = $region24
      $region23: #{tpu_custom_call.1} parent=11 // pred_region
        _
      $region24: #{tpu_custom_call.1} parent=11 // pred_fallthru
        _
      // Predicated region
      $region25: #{tpu_custom_call.1} parent=11 // pred_check
        %p330 = pneg %p170
      $region26: #{tpu_custom_call.1} parent=11 // pred_check_branch
        %332 = sbr.rel (%p330) target = $region28
      $region27: #{tpu_custom_call.1} parent=11 // pred_region
        _
      $region28: #{tpu_custom_call.1} parent=11 // pred_fallthru
        _
      // Predicated region
      $region29: #{tpu_custom_call.1} parent=11 // pred_check
        %p333 = pneg %p191
      $region30: #{tpu_custom_call.1} parent=11 // pred_check_branch
        %335 = sbr.rel (%p333) target = $region32
      $region31: #{tpu_custom_call.1} parent=11 // pred_region
        _
      $region32: #{tpu_custom_call.1} parent=11 // pred_fallthru
        _
      // Predicated region
      $region33: #{tpu_custom_call.1} parent=11 // pred_check
        %p336 = pneg %p212
      $region34: #{tpu_custom_call.1} parent=11 // pred_check_branch
        %338 = sbr.rel (%p336) target = $region36
      $region35: #{tpu_custom_call.1} parent=11 // pred_region
        _
      $region36: #{tpu_custom_call.1} parent=11 // pred_fallthru
        _
      // Predicated region
      $region37: #{tpu_custom_call.1} parent=11 // pred_check
        %p339 = pneg %p233
      $region38: #{tpu_custom_call.1} parent=11 // pred_check_branch
        %341 = sbr.rel (%p339) target = $region40
      $region39: #{tpu_custom_call.1} parent=11 // pred_region
        _
      $region40: #{tpu_custom_call.1} parent=11 // pred_fallthru
        _
      // Predicated region
      $region41: #{tpu_custom_call.1} parent=11 // pred_check
        %p342 = pneg %p254
      $region42: #{tpu_custom_call.1} parent=11 // pred_check_branch
        %344 = sbr.rel (%p342) target = $region44
      $region43: #{tpu_custom_call.1} parent=11 // pred_region
        _
      $region44: #{tpu_custom_call.1} parent=11 // pred_fallthru
        _
    $region12: #{tpu_custom_call.1} parent=5 // pred_fallthru
      _
    %p345 = scmp.lt.s32.totalorder %s18, 2
    // Predicated region
    $region45: #{tpu_custom_call.1} parent=5 // pred_check
      %p346 = pneg %p345
    $region46: #{tpu_custom_call.1} parent=5 // pred_check_branch
      %348 = sbr.rel (%p346) target = $region48
    $region47: #{tpu_custom_call.1} parent=5 // pred_region
      // Predicated region
      $region49: #{tpu_custom_call.1} parent=47 // pred_check
        %p349 = pneg %p52
      $region50: #{tpu_custom_call.1} parent=47 // pred_check_branch
        %351 = sbr.rel (%p349) target = $region52
      $region51: #{tpu_custom_call.1} parent=47 // pred_region
        %s352 = smul.u32 2, %s26
        %p353 = scmp.lt.s32.totalorder %s25, 1
        %s354 = scalar_select %p353, %s25, 1
        %p355 = scmp.lt.s32.totalorder %s352, 1
        %s356 = scalar_select %p355, %s352, 1
        %s357 = smul.addr %s354, 2
        %s358 = sadd.s32 %s356, %s357
        %s359 = smul.addr %s358, 2
        %s360 = scalar_lea.vmem %s0, %s359
        %s361 = smul.u32 2, %s26
      $region52: #{tpu_custom_call.1} parent=47 // pred_fallthru
        _
      // Predicated region
      $region53: #{tpu_custom_call.1} parent=47 // pred_check
        %p362 = pneg %p80
      $region54: #{tpu_custom_call.1} parent=47 // pred_check_branch
        %364 = sbr.rel (%p362) target = $region56
      $region55: #{tpu_custom_call.1} parent=47 // pred_region
        %s365 = smul.u32 2, %s26
        %p366 = scmp.lt.s32.totalorder %s25, 1
        %s367 = scalar_select %p366, %s25, 1
        %p368 = scmp.lt.s32.totalorder %s365, 1
        %s369 = scalar_select %p368, %s365, 1
        %s370 = smul.addr %s367, 2
        %s371 = sadd.s32 %s369, %s370
        %s372 = smul.addr %s371, 2
        %s373 = scalar_lea.vmem %s1, %s372
        %s374 = smul.u32 2, %s26
      $region56: #{tpu_custom_call.1} parent=47 // pred_fallthru
        _
    $region48: #{tpu_custom_call.1} parent=5 // pred_fallthru
      _
    %p375 = scmp.le.s32.totalorder 1, %s18
    %p376 = scmp.lt.s32.totalorder %s18, 3
    %p377 = pnand %p375, %p376
    %p378 = pneg %p377
    // Predicated region
    $region57: #{tpu_custom_call.1} parent=5 // pred_check
      _
    $region58: #{tpu_custom_call.1} parent=5 // pred_check_branch
      %380 = sbr.rel (%p377) target = $region60
    $region59: #{tpu_custom_call.1} parent=5 // pred_region
      %s381 = ssub.s32 %s18, 1
      %s382 = smul.u32 2, %s28
      %p383 = scmp.lt.s32.totalorder %s27, 1
      %s384 = scalar_select %p383, %s27, 1
      %p385 = scmp.lt.s32.totalorder %s382, 1
      %s386 = scalar_select %p385, %s382, 1
      %s387 = smul.addr %s384, 2
      %s388 = sadd.s32 %s386, %s387
      %s389 = smul.addr %s388, 2
      %s390 = scalar_lea.vmem %s0, %s389
      %p391 = pneg %p58
      %p392 = pneg %p55
      %s393 = smul.u32 2, %s28
      %p394 = scmp.lt.s32.totalorder %s27, 1
      %s395 = scalar_select %p394, %s27, 1
      %p396 = scmp.lt.s32.totalorder %s393, 1
      %s397 = scalar_select %p396, %s393, 1
      %s398 = smul.addr %s395, 2
      %s399 = sadd.s32 %s397, %s398
      %s400 = smul.addr %s399, 2
      %s401 = scalar_lea.vmem %s1, %s400
      %p402 = pneg %p86
      %p403 = pneg %p83
      %p404 = pneg %p107
      %p405 = pneg %p104
      %p406 = pneg %p128
      %p407 = pneg %p125
      %p408 = pneg %p149
      %p409 = pneg %p146
      %p410 = pneg %p170
      %p411 = pneg %p167
      %p412 = pneg %p191
      %p413 = pneg %p188
      %p414 = pneg %p212
      %p415 = pneg %p209
      %p416 = pneg %p233
      %p417 = pneg %p230
      %p418 = pneg %p254
      %p419 = pneg %p251
      %p420 = pneg %p280
      %p421 = pneg %p277
      %p422 = scmp.lt.s32.totalorder %s27, 1
      %s423 = scalar_select %p422, %s27, 1
      %s424 = smul.addr %s423, 4
      %s425 = scalar_lea.vmem %s10, %s424
      %p426 = pneg %p306
      %p427 = pneg %p303
      %p428 = scmp.lt.s32.totalorder %s27, 1
      %s429 = scalar_select %p428, %s27, 1
      %s430 = smul.addr %s429, 4
      %s431 = scalar_lea.vmem %s11, %s430
      %s432 = smul.u32 2, %s28
      %p433 = scmp.lt.s32.totalorder %s27, 1
      %s434 = scalar_select %p433, %s27, 1
      %p435 = scmp.lt.s32.totalorder %s432, 1
      %s436 = scalar_select %p435, %s432, 1
      %s437 = smul.addr %s434, 2
      %s438 = sadd.s32 %s436, %s437
      %s439 = smul.addr %s438, 2
      %s440 = scalar_lea.vmem %s0, %s439
      %s441 = smul.u32 2, %s28
      %s442 = smul.u32 2, %s28
      %p443 = scmp.lt.s32.totalorder %s27, 1
      %s444 = scalar_select %p443, %s27, 1
      %p445 = scmp.lt.s32.totalorder %s442, 1
      %s446 = scalar_select %p445, %s442, 1
      %s447 = smul.addr %s444, 2
      %s448 = sadd.s32 %s446, %s447
      %s449 = smul.addr %s448, 2
      %s450 = scalar_lea.vmem %s1, %s449
      %s451 = smul.u32 2, %s28
      %p452 = scmp.lt.s32.totalorder %s27, 1
      %s453 = scalar_select %p452, %s27, 1
      %s454 = smul.addr %s453, 4
      %s455 = scalar_lea.vmem %s10, %s454
      %p456 = scmp.lt.s32.totalorder %s27, 1
      %s457 = scalar_select %p456, %s27, 1
      %s458 = smul.addr %s457, 4
      %s459 = scalar_lea.vmem %s11, %s458
      %p461 = scmp.eq.s32.totalorder %s28, 0
      // Predicated region
      $region61: #{tpu_custom_call.1} parent=59 // pred_check
        %p462 = pneg %p461
      $region62: #{tpu_custom_call.1} parent=59 // pred_check_branch
        %464 = sbr.rel (%p462) target = $region64
      $region63: #{tpu_custom_call.1} parent=59 // pred_region
        %465 = vst [vmem:[#allocation2] sm:$0xff] 0.0
        %466 = vst [vmem:[#allocation3] sm:$0xff] 0.0
      $region64: #{tpu_custom_call.1} parent=59 // pred_fallthru
        _
      %v467 = vld [vmem:[%s440] sm:$0xf]
      %v468 = vld [vmem:[%s2] sm:$0x3]
      %v469 = vld [vmem:[%s3] sm:$0xf]
      %471 = vset.pattern.permute.xlu0 0
      %472 = vperm.xlu0 %471, %v469
      %v473 = vpop.permute.xlu0 %472
      %v477 = vunpack.c.l.s4 1983009808
      %v478 = vunpack.c.0.s8 %v477
      %v479 = vlaneseq
      %v480 = vshrl.u32 %v479, 7
      %v481 = vsub.s32 %v478, %v480
      %v482 = vrot.slane %v467, %v481
      %v483 = vcombine.high %v482, %v482
      %vm484 = vcmask 31744
      %v486 = vsel %vm484, %v468, 0
      %vm488 = vcmask 1041408
      %v490 = vsel %vm488, %v482, 0
      %v493 = vsel %vm488, %v483, 0
      %495 = vmatprep.subr.bf16.mxu0 %v493
      %496 = vmatpush1.bf16.msra.mxu0 %v490
      %497 = vmatprep.subr.bf16.mxu0 0
      %498 = vmatpush1.bf16.msra.mxu0 0
      %499 = vmatprep.subr.bf16.mxu0 0
      %500 = vmatpush1.bf16.msra.mxu0 0
      %501 = vmatprep.subr.bf16.mxu0 0
      %502 = vmatpush1.bf16.msra.mxu0 0
      %503 = vmatprep.subr.bf16.mxu0 0
      %504 = vmatpush1.bf16.msra.mxu0 0
      %505 = vmatprep.subr.bf16.mxu0 0
      %506 = vmatpush1.bf16.msra.mxu0 0
      %507 = vmatprep.subr.bf16.mxu0 0
      %508 = vmatpush1.bf16.msra.mxu0 0
      %509 = vmatprep.subr.bf16.mxu0 0
      %510 = vmatpush1.bf16.msra.mxu0 0
      %511 = vmatprep.subr.bf16.mxu0 0
      %512 = vmatpush1.bf16.msra.mxu0 0
      %513 = vmatprep.subr.bf16.mxu0 0
      %514 = vmatpush1.bf16.msra.mxu0 0
      %515 = vmatprep.subr.bf16.mxu0 0
      %516 = vmatpush1.bf16.msra.mxu0 0
      %517 = vmatprep.subr.bf16.mxu0 0
      %518 = vmatpush1.bf16.msra.mxu0 0
      %519 = vmatprep.subr.bf16.mxu0 0
      %520 = vmatpush1.bf16.msra.mxu0 0
      %521 = vmatprep.subr.bf16.mxu0 0
      %522 = vmatpush1.bf16.msra.mxu0 0
      %523 = vmatprep.subr.bf16.mxu0 0
      %524 = vmatpush1.bf16.msra.mxu0 0
      %525 = vmatprep.subr.bf16.mxu0 0
      %526 = vmatpush1.bf16.msra.mxu0 0
      %527 = vmatprep.mubr.bf16.mxu0 0
      %528 = vmatmul.mubr.bf16.gmra.mrb[0].mxu0 %v486
      %v529 = vpop.f32.mrb[0].mxu0
      %v530 = vadd.f32 %v473, %v529
      %v531 = vpop.f32.mrb[0].mxu0
      %v532 = vadd.f32 %v473, %v531
      %v533 = vpop.f32.mrb[0].mxu0
      %v534 = vpop.f32.mrb[0].mxu0
      %535 = vdwg.mxu0
      %v536 = vmax.f32 %v530, 0.0
      %v537 = vmax.f32 %v532, 0.0
      %v538 = vunpack.c.l.bf16 %v467
      %v541 = vcombine.low %v536, %v537
      %v543 = vmul.f32 %v538, %v541
      %v544 = vld [vmem:[#allocation2] sm:$0xff]
      %v545 = vadd.f32 %v544, %v543
      %546 = vst [vmem:[#allocation2] sm:$0xff] %v545
      %v547 = vld [vmem:[%s450] sm:$0xf]
      %v548 = vld [vmem:[%s6] sm:$0x3]
      %v549 = vld [vmem:[%s7] sm:$0xf]
      %551 = vset.pattern.permute.xlu0 0
      %552 = vperm.xlu0 %551, %v549
      %v553 = vpop.permute.xlu0 %552
      %v557 = vunpack.c.l.s4 1983009808
      %v558 = vunpack.c.0.s8 %v557
      %v559 = vlaneseq
      %v560 = vshrl.u32 %v559, 7
      %v561 = vsub.s32 %v558, %v560
      %v562 = vrot.slane %v547, %v561
      %v563 = vcombine.high %v562, %v562
      %v565 = vsel %vm484, %v548, 0
      %v568 = vsel %vm488, %v562, 0
      %v571 = vsel %vm488, %v563, 0
      %573 = vmatprep.subr.bf16.mxu0 %v571
      %574 = vmatpush1.bf16.msra.mxu0 %v568
      %575 = vmatprep.subr.bf16.mxu0 0
      %576 = vmatpush1.bf16.msra.mxu0 0
      %577 = vmatprep.subr.bf16.mxu0 0
      %578 = vmatpush1.bf16.msra.mxu0 0
      %579 = vmatprep.subr.bf16.mxu0 0
      %580 = vmatpush1.bf16.msra.mxu0 0
      %581 = vmatprep.subr.bf16.mxu0 0
      %582 = vmatpush1.bf16.msra.mxu0 0
      %583 = vmatprep.subr.bf16.mxu0 0
      %584 = vmatpush1.bf16.msra.mxu0 0
      %585 = vmatprep.subr.bf16.mxu0 0
      %586 = vmatpush1.bf16.msra.mxu0 0
      %587 = vmatprep.subr.bf16.mxu0 0
      %588 = vmatpush1.bf16.msra.mxu0 0
      %589 = vmatprep.subr.bf16.mxu0 0
      %590 = vmatpush1.bf16.msra.mxu0 0
      %591 = vmatprep.subr.bf16.mxu0 0
      %592 = vmatpush1.bf16.msra.mxu0 0
      %593 = vmatprep.subr.bf16.mxu0 0
      %594 = vmatpush1.bf16.msra.mxu0 0
      %595 = vmatprep.subr.bf16.mxu0 0
      %596 = vmatpush1.bf16.msra.mxu0 0
      %597 = vmatprep.subr.bf16.mxu0 0
      %598 = vmatpush1.bf16.msra.mxu0 0
      %599 = vmatprep.subr.bf16.mxu0 0
      %600 = vmatpush1.bf16.msra.mxu0 0
      %601 = vmatprep.subr.bf16.mxu0 0
      %602 = vmatpush1.bf16.msra.mxu0 0
      %603 = vmatprep.subr.bf16.mxu0 0
      %604 = vmatpush1.bf16.msra.mxu0 0
      %605 = vmatprep.mubr.bf16.mxu0 0
      %606 = vmatmul.mubr.bf16.gmra.mrb[0].mxu0 %v565
      %v607 = vpop.f32.mrb[0].mxu0
      %v608 = vadd.f32 %v553, %v607
      %v609 = vpop.f32.mrb[0].mxu0
      %v610 = vadd.f32 %v553, %v609
      %v611 = vpop.f32.mrb[0].mxu0
      %v612 = vpop.f32.mrb[0].mxu0
      %613 = vdwg.mxu0
      %v614 = vmax.f32 %v608, 0.0
      %v615 = vmax.f32 %v610, 0.0
      %v616 = vunpack.c.l.bf16 %v547
      %v619 = vcombine.low %v614, %v615
      %v621 = vmul.f32 %v616, %v619
      %v622 = vld [vmem:[#allocation3] sm:$0xff]
      %v623 = vadd.f32 %v622, %v621
      %624 = vst [vmem:[#allocation3] sm:$0xff] %v623
      // Predicated region
      $region65: #{tpu_custom_call.1} parent=59 // pred_check
        %p625 = pneg %p461
      $region66: #{tpu_custom_call.1} parent=59 // pred_check_branch
        %627 = sbr.rel (%p625) target = $region68
      $region67: #{tpu_custom_call.1} parent=59 // pred_region
        %v628 = vld [vmem:[#allocation2] sm:$0xff]
        %v630 = vcombine.high %v628, %v628
        %vm632 = vcmask 1043456
        %v633 = vsel %vm632, %v628, 0.0
        %v634 = vsel %vm632, %v630, 0.0
        %v635 = vadd.f32 %v633, %v634
        %636 = vadd.xlane.f32.xlu0 %v635
        %v637 = vpop.xlane.xlu0 %636
        %v638 = vmul.f32 %v637, 0.00390625
        %v639 = vld [vmem:[%s4] sm:$0xf]
        %v640 = vld [vmem:[%s5] sm:$0xf]
        %v642 = vsel %vm484, %v639, 0
        %v645 = vsel %vm632, %v638, 0
        %647 = vmatprep.subr.mxu0 0.0
        %648 = vmatpush1.msra.mxu0 %v645
        %649 = vmatprep.subr.mxu0 0.0
        %650 = vmatpush1.msra.mxu0 0.0
        %651 = vmatprep.subr.mxu0 0.0
        %652 = vmatpush1.msra.mxu0 0.0
        %653 = vmatprep.subr.mxu0 0.0
        %654 = vmatpush1.msra.mxu0 0.0
        %655 = vmatprep.subr.mxu0 0.0
        %656 = vmatpush1.msra.mxu0 0.0
        %657 = vmatprep.subr.mxu0 0.0
        %658 = vmatpush1.msra.mxu0 0.0
        %659 = vmatprep.subr.mxu0 0.0
        %660 = vmatpush1.msra.mxu0 0.0
        %661 = vmatprep.subr.mxu0 0.0
        %662 = vmatpush1.msra.mxu0 0.0
        %663 = vmatprep.subr.mxu0 0.0
        %664 = vmatpush1.msra.mxu0 0.0
        %665 = vmatprep.subr.mxu0 0.0
        %666 = vmatpush1.msra.mxu0 0.0
        %667 = vmatprep.subr.mxu0 0.0
        %668 = vmatpush1.msra.mxu0 0.0
        %669 = vmatprep.subr.mxu0 0.0
        %670 = vmatpush1.msra.mxu0 0.0
        %671 = vmatprep.subr.mxu0 0.0
        %672 = vmatpush1.msra.mxu0 0.0
        %673 = vmatprep.subr.mxu0 0.0
        %674 = vmatpush1.msra.mxu0 0.0
        %675 = vmatprep.subr.mxu0 0.0
        %676 = vmatpush1.msra.mxu0 0.0
        %677 = vmatprep.subr.mxu0 0.0
        %678 = vmatpush1.msra.mxu0 0.0
        %679 = vmatprep.subr.mxu0 0.0
        %680 = vmatpush1.msra.mxu0 0.0
        %681 = vmatprep.subr.mxu0 0.0
        %682 = vmatpush1.msra.mxu0 0.0
        %683 = vmatprep.subr.mxu0 0.0
        %684 = vmatpush1.msra.mxu0 0.0
        %685 = vmatprep.subr.mxu0 0.0
        %686 = vmatpush1.msra.mxu0 0.0
        %687 = vmatprep.subr.mxu0 0.0
        %688 = vmatpush1.msra.mxu0 0.0
        %689 = vmatprep.subr.mxu0 0.0
        %690 = vmatpush1.msra.mxu0 0.0
        %691 = vmatprep.subr.mxu0 0.0
        %692 = vmatpush1.msra.mxu0 0.0
        %693 = vmatprep.subr.mxu0 0.0
        %694 = vmatpush1.msra.mxu0 0.0
        %695 = vmatprep.subr.mxu0 0.0
        %696 = vmatpush1.msra.mxu0 0.0
        %697 = vmatprep.subr.mxu0 0.0
        %698 = vmatpush1.msra.mxu0 0.0
        %699 = vmatprep.subr.mxu0 0.0
        %700 = vmatpush1.msra.mxu0 0.0
        %701 = vmatprep.subr.mxu0 0.0
        %702 = vmatpush1.msra.mxu0 0.0
        %703 = vmatprep.subr.mxu0 0.0
        %704 = vmatpush1.msra.mxu0 0.0
        %705 = vmatprep.subr.mxu0 0.0
        %706 = vmatpush1.msra.mxu0 0.0
        %707 = vmatprep.subr.mxu0 0.0
        %708 = vmatpush1.msra.mxu0 0.0
        %709 = vmatprep.subr.mxu0 0.0
        %710 = vmatpush1.msra.mxu0 0.0
        %711 = vmatprep.mubr.f32.mxu0 0.0
        %712 = vmatmul.mubr.f32.gmra.mrb[0].mxu0 %v642
        %v713 = vpop.f32.mrb[0].mxu0
        %v714 = vadd.f32 %v640, %v713
        %v715 = vpop.f32.mrb[0].mxu0
        %716 = vdwg.mxu0
        %v717 = vmax.f32 %v714, 0.0
        %v718 = vxor.u32 %v717, 2147483648
        %v719 = vmul.f32 %v718, 1.442695
        %v720 = vpow.pop %v719
        %v721 = vadd.f32 %v720, 1.0
        %v722 = vrcp.pop %v721
        %v723 = vmul.f32 1.0, %v722
        %vm724 = vcmask 3072
        %725 = vst.msk [vmem:[%s455] sm:$0xf] %vm724, %v723
        %v726 = vld [vmem:[#allocation3] sm:$0xff]
        %v728 = vcombine.high %v726, %v726
        %v730 = vsel %vm632, %v726, 0.0
        %v731 = vsel %vm632, %v728, 0.0
        %v732 = vadd.f32 %v730, %v731
        %733 = vadd.xlane.f32.xlu0 %v732
        %v734 = vpop.xlane.xlu0 %733
        %v735 = vmul.f32 %v734, 0.00390625
        %v736 = vld [vmem:[%s8] sm:$0xf]
        %v737 = vld [vmem:[%s9] sm:$0xf]
        %v739 = vsel %vm484, %v736, 0
        %v742 = vsel %vm632, %v735, 0
        %744 = vmatprep.subr.mxu0 0.0
        %745 = vmatpush1.msra.mxu0 %v742
        %746 = vmatprep.subr.mxu0 0.0
        %747 = vmatpush1.msra.mxu0 0.0
        %748 = vmatprep.subr.mxu0 0.0
        %749 = vmatpush1.msra.mxu0 0.0
        %750 = vmatprep.subr.mxu0 0.0
        %751 = vmatpush1.msra.mxu0 0.0
        %752 = vmatprep.subr.mxu0 0.0
        %753 = vmatpush1.msra.mxu0 0.0
        %754 = vmatprep.subr.mxu0 0.0
        %755 = vmatpush1.msra.mxu0 0.0
        %756 = vmatprep.subr.mxu0 0.0
        %757 = vmatpush1.msra.mxu0 0.0
        %758 = vmatprep.subr.mxu0 0.0
        %759 = vmatpush1.msra.mxu0 0.0
        %760 = vmatprep.subr.mxu0 0.0
        %761 = vmatpush1.msra.mxu0 0.0
        %762 = vmatprep.subr.mxu0 0.0
        %763 = vmatpush1.msra.mxu0 0.0
        %764 = vmatprep.subr.mxu0 0.0
        %765 = vmatpush1.msra.mxu0 0.0
        %766 = vmatprep.subr.mxu0 0.0
        %767 = vmatpush1.msra.mxu0 0.0
        %768 = vmatprep.subr.mxu0 0.0
        %769 = vmatpush1.msra.mxu0 0.0
        %770 = vmatprep.subr.mxu0 0.0
        %771 = vmatpush1.msra.mxu0 0.0
        %772 = vmatprep.subr.mxu0 0.0
        %773 = vmatpush1.msra.mxu0 0.0
        %774 = vmatprep.subr.mxu0 0.0
        %775 = vmatpush1.msra.mxu0 0.0
        %776 = vmatprep.subr.mxu0 0.0
        %777 = vmatpush1.msra.mxu0 0.0
        %778 = vmatprep.subr.mxu0 0.0
        %779 = vmatpush1.msra.mxu0 0.0
        %780 = vmatprep.subr.mxu0 0.0
        %781 = vmatpush1.msra.mxu0 0.0
        %782 = vmatprep.subr.mxu0 0.0
        %783 = vmatpush1.msra.mxu0 0.0
        %784 = vmatprep.subr.mxu0 0.0
        %785 = vmatpush1.msra.mxu0 0.0
        %786 = vmatprep.subr.mxu0 0.0
        %787 = vmatpush1.msra.mxu0 0.0
        %788 = vmatprep.subr.mxu0 0.0
        %789 = vmatpush1.msra.mxu0 0.0
        %790 = vmatprep.subr.mxu0 0.0
        %791 = vmatpush1.msra.mxu0 0.0
        %792 = vmatprep.subr.mxu0 0.0
        %793 = vmatpush1.msra.mxu0 0.0
        %794 = vmatprep.subr.mxu0 0.0
        %795 = vmatpush1.msra.mxu0 0.0
        %796 = vmatprep.subr.mxu0 0.0
        %797 = vmatpush1.msra.mxu0 0.0
        %798 = vmatprep.subr.mxu0 0.0
        %799 = vmatpush1.msra.mxu0 0.0
        %800 = vmatprep.subr.mxu0 0.0
        %801 = vmatpush1.msra.mxu0 0.0
        %802 = vmatprep.subr.mxu0 0.0
        %803 = vmatpush1.msra.mxu0 0.0
        %804 = vmatprep.subr.mxu0 0.0
        %805 = vmatpush1.msra.mxu0 0.0
        %806 = vmatprep.subr.mxu0 0.0
        %807 = vmatpush1.msra.mxu0 0.0
        %808 = vmatprep.mubr.f32.mxu0 0.0
        %809 = vmatmul.mubr.f32.gmra.mrb[0].mxu0 %v739
        %v810 = vpop.f32.mrb[0].mxu0
        %v811 = vadd.f32 %v737, %v810
        %v812 = vpop.f32.mrb[0].mxu0
        %813 = vdwg.mxu0
        %v814 = vmax.f32 %v811, 0.0
        %v815 = vxor.u32 %v814, 2147483648
        %v816 = vmul.f32 %v815, 1.442695
        %v817 = vpow.pop %v816
        %v818 = vadd.f32 %v817, 1.0
        %v819 = vrcp.pop %v818
        %v820 = vmul.f32 1.0, %v819
        %821 = vst.msk [vmem:[%s459] sm:$0xf] %vm724, %v820
      $region68: #{tpu_custom_call.1} parent=59 // pred_fallthru
        _
      %p822 = scmp.lt.s32.totalorder %s27, 1
      %s823 = scalar_select %p822, %s27, 1
      %s824 = smul.addr %s823, 4
      %s825 = scalar_lea.vmem %s10, %s824
      %p826 = scmp.lt.s32.totalorder %s27, 1
      %s827 = scalar_select %p826, %s27, 1
      %s828 = smul.addr %s827, 4
      %s829 = scalar_lea.vmem %s11, %s828
      // Predicated region
      $region69: #{tpu_custom_call.1} parent=59 // pred_check
        %p830 = pneg %p277
      $region70: #{tpu_custom_call.1} parent=59 // pred_check_branch
        %832 = sbr.rel (%p830) target = $region72
      $region71: #{tpu_custom_call.1} parent=59 // pred_region
        _
      $region72: #{tpu_custom_call.1} parent=59 // pred_fallthru
        _
      // Predicated region
      $region73: #{tpu_custom_call.1} parent=59 // pred_check
        %p833 = pneg %p303
      $region74: #{tpu_custom_call.1} parent=59 // pred_check_branch
        %835 = sbr.rel (%p833) target = $region76
      $region75: #{tpu_custom_call.1} parent=59 // pred_region
        _
      $region76: #{tpu_custom_call.1} parent=59 // pred_fallthru
        _
    $region60: #{tpu_custom_call.1} parent=5 // pred_fallthru
      _
    %p836 = scmp.le.s32.totalorder 2, %s18
    // Predicated region
    $region77: #{tpu_custom_call.1} parent=5 // pred_check
      %p837 = pneg %p836
    $region78: #{tpu_custom_call.1} parent=5 // pred_check_branch
      %839 = sbr.rel (%p837) target = $region80
    $region79: #{tpu_custom_call.1} parent=5 // pred_region
      %s840 = ssub.s32 %s18, 2
      // Predicated region
      $region81: #{tpu_custom_call.1} parent=79 // pred_check
        %p841 = pneg %p283
      $region82: #{tpu_custom_call.1} parent=79 // pred_check_branch
        %843 = sbr.rel (%p841) target = $region84
      $region83: #{tpu_custom_call.1} parent=79 // pred_region
        %p844 = scmp.lt.s32.totalorder %s29, 1
        %s845 = scalar_select %p844, %s29, 1
        %s846 = smul.addr %s845, 4
        %s847 = scalar_lea.vmem %s10, %s846
      $region84: #{tpu_custom_call.1} parent=79 // pred_fallthru
        _
      // Predicated region
      $region85: #{tpu_custom_call.1} parent=79 // pred_check
        %p848 = pneg %p309
      $region86: #{tpu_custom_call.1} parent=79 // pred_check_branch
        %850 = sbr.rel (%p848) target = $region88
      $region87: #{tpu_custom_call.1} parent=79 // pred_region
        %p851 = scmp.lt.s32.totalorder %s29, 1
        %s852 = scalar_select %p851, %s29, 1
        %s853 = smul.addr %s852, 4
        %s854 = scalar_lea.vmem %s11, %s853
      $region88: #{tpu_custom_call.1} parent=79 // pred_fallthru
        _
    $region80: #{tpu_custom_call.1} parent=5 // pred_fallthru
      _
  $region6: #{tpu_custom_call.1} parent=0 // loop_footer
    %s22 = sadd.s32 1, %s18
  $region7: #{tpu_custom_call.1} parent=0 // loop_footer_branch
    %17 = sbr.rel target = $region3
  $region8: #{tpu_custom_call.1} parent=0 // loop_exit
    _

</llo_original>
